<compile_context>
chip_gen: v5e
topology: v5e:2x2
jax: 0.10.0
libtpu: 0.0.40
codegen_flags: <defaults>
</compile_context>

<pallas_src>
import jax
import jax.numpy as jnp
import numpy as np
from jax.experimental import pallas as pl
from jax.experimental.pallas import tpu as pltpu

EPS = 1e-5
K = 5      # conv kernel size
PAD = 2    # conv padding


# ---------------------------------------------------------------------------
# Fused Pallas kernel (channels on sublanes, (batch, length) flattened on lanes)
# ---------------------------------------------------------------------------
def _up_double_conv_kernel(x1_ref, x2_ref, m_ref, w1_ref, g1_ref, be1_ref,
                           w2_ref, g2_ref, be2_ref, o_ref):
    # x1_ref: (N*C1, L1) bf16   rows ordered (n, c1)  -- raw x1, upsampled in-kernel
    # x2_ref: (N, C2, L2) bf16                         -- skip connection
    # m_ref : (L1, L2)  bf16    upsample(align_corners=True) + zero-pad matrix
    # w1_ref: (Cmid, K*Cin) bf16; w2_ref: (Cout, K*Cmid) bf16  (row-major over (k, ci))
    # g*/be*: (C, 1) f32        BatchNorm affine params
    # o_ref : (Cout, N*L2) f32  lane-dense output slab (wrapper reshapes to NCL)
    NC1, _ = x1_ref.shape
    N, C2, L2 = x2_ref.shape
    C1 = NC1 // N
    NL2 = N * L2

    # ---- fused upsample + pad: one batched MXU matmul ----
    x1u = jnp.dot(x1_ref[...], m_ref[...],
                  preferred_element_type=jnp.float32).astype(jnp.bfloat16)   # (N*C1, L2)

    # ---- channel-concat input with lanes blocked per batch element ----
    x2_cat = jnp.concatenate([x2_ref[n] for n in range(N)], axis=1)          # (C2, NL2)
    x1_cat = jnp.concatenate([x1u[n * C1:(n + 1) * C1, :] for n in range(N)],
                             axis=1)                                         # (C1, NL2)
    xin = jnp.concatenate([x2_cat, x1_cat], axis=0)                          # (Cin, NL2)

    # Hoisted per-lane "position inside the batch segment" and boundary masks
    # (handle both conv zero-padding and batch-boundary isolation in one shot).
    lane = jax.lax.broadcasted_iota(jnp.int32, (1, NL2), 1) % L2
    masks = {}
    for k in range(K):
        s = k - PAD
        if s > 0:
            masks[s] = lane < (L2 - s)
        elif s < 0:
            masks[s] = lane >= (-s)

    def im2col(x):
        # x: (C, NL2) -> (K*C, NL2); row k*C + c at lane (n*L2 + l) equals
        # x[c, n*L2 + l + k - PAD] when 0 <= l+k-PAD < L2, else 0.
        rows = []
        for k in range(K):
            s = k - PAD
            if s == 0:
                rows.append(x)
            else:
                rolled = jnp.concatenate([x[:, s:], x[:, :s]], axis=1)       # lane roll by -s
                rows.append(jnp.where(masks[s], rolled, 0).astype(x.dtype))
        return jnp.concatenate(rows, axis=0)

    # ---- conv1: single fat MXU matmul over all batch elements ----
    # Conv bias omitted: it cancels exactly under training-mode BatchNorm.
    y1 = jnp.dot(w1_ref[...], im2col(xin),
                 preferred_element_type=jnp.float32)                          # (Cmid, NL2)

    # ---- BN1 (training-mode batch stats over (N, L), two-pass) + ReLU ----
    mean1 = jnp.mean(y1, axis=1, keepdims=True)
    var1 = jnp.mean((y1 - mean1) ** 2, axis=1, keepdims=True)
    scale1 = g1_ref[...] * jax.lax.rsqrt(var1 + EPS)
    shift1 = be1_ref[...] - mean1 * scale1
    h = jnp.maximum(y1 * scale1 + shift1, 0.0)                                # f32

    # ---- conv2 ----
    y2 = jnp.dot(w2_ref[...], im2col(h.astype(jnp.bfloat16)),
                 preferred_element_type=jnp.float32)                          # (Cout, NL2)

    # ---- BN2 + ReLU + single lane-dense store ----
    mean2 = jnp.mean(y2, axis=1, keepdims=True)
    var2 = jnp.mean((y2 - mean2) ** 2, axis=1, keepdims=True)
    scale2 = g2_ref[...] * jax.lax.rsqrt(var2 + EPS)
    shift2 = be2_ref[...] - mean2 * scale2
    o_ref[...] = jnp.maximum(y2 * scale2 + shift2, 0.0).astype(o_ref.dtype)


# ---------------------------------------------------------------------------
# Wrapper: precompute upsample+pad matrix & flattened conv weights, call kernel
# ---------------------------------------------------------------------------
def _upsample_pad_matrix(L_in, L_up, L_target):
    """(L_in, L_target): linear x2 upsample (align_corners=True) then zero pad."""
    diff = L_target - L_up
    assert diff >= 0  # TODO(synk): negative diff (cropping) not handled
    left = diff // 2
    m = np.zeros((L_in, L_target), np.float32)
    if L_in == 1:
        m[0, left:left + L_up] = 1.0
    else:
        pos = np.arange(L_up) * (L_in - 1) / (L_up - 1)
        lo = np.floor(pos).astype(np.int64)
        hi = np.minimum(lo + 1, L_in - 1)
        frac = (pos - lo).astype(np.float32)
        cols = left + np.arange(L_up)
        m[lo, cols] += (1.0 - frac)
        m[hi, cols] += frac
    return m


def up_forward(x1, x2, params):
    # x1: (N, C1, L1), x2: (N, C2, L2) in PyTorch NCL layout (float32).
    w1, b1, g1, be1, w2, b2, g2, be2 = params   # b1/b2 unused: cancel in training-mode BN
    N, C1, L1 = x1.shape
    _, C2, L2 = x2.shape
    Cin = C1 + C2
    Cmid = w1.shape[0]
    Cout = w2.shape[0]
    NL2 = N * L2

    # bf16 matmul operands (MXU-native), f32 accumulation inside the kernel.
    m = jnp.asarray(_upsample_pad_matrix(L1, 2 * L1, L2), jnp.bfloat16)       # (L1, L2)
    x1_2d = x1.reshape(N * C1, L1).astype(jnp.bfloat16)                       # rows (n, c1)
    x2_b = x2.astype(jnp.bfloat16)
    # Flatten torch (O, I, K) weights to (O, K*I), row-major over (k, ci), matching im2col.
    w1_2d = jnp.transpose(w1, (0, 2, 1)).reshape(Cmid, K * Cin).astype(jnp.bfloat16)
    w2_2d = jnp.transpose(w2, (0, 2, 1)).reshape(Cout, K * Cmid).astype(jnp.bfloat16)

    flops = 2 * (N * C1 * L1 * L2 + Cmid * (K * Cin) * NL2 + Cout * (K * Cmid) * NL2)
    bytes_accessed = (2 * (x1_2d.size + x2_b.size + m.size + w1_2d.size + w2_2d.size)
                      + 4 * (2 * (Cmid + Cout) + Cout * NL2))

    # Generation-aware VMEM limit: size from the actual footprint, clamp with headroom
    # against the chip's physical VMEM (64 MiB on v7x, 128 MiB on v5e/v6e).
    try:
        vmem_cap = pltpu.get_tpu_info().vmem_capacity_bytes
    except Exception:
        vmem_cap = 64 * 1024 * 1024
    footprint = (2 * (x1_2d.size + x2_b.size + m.size + w1_2d.size + w2_2d.size)
                 + 2 * NL2 * (2 * Cin + K * Cin + K * Cmid)    # bf16 activations / im2col
                 + 4 * NL2 * (3 * (Cmid + Cout))               # f32 conv outputs / BN temps
                 + 4 * Cout * NL2)                             # f32 output slab
    vmem_limit = int(min(max(8 * footprint, 16 * 1024 * 1024), int(0.75 * vmem_cap)))

    y2d = pl.pallas_call(
        _up_double_conv_kernel,
        out_shape=jax.ShapeDtypeStruct((Cout, NL2), jnp.float32),
        in_specs=[pl.BlockSpec(memory_space=pltpu.MemorySpace.VMEM)] * 9,
        out_specs=pl.BlockSpec(memory_space=pltpu.MemorySpace.VMEM),
        cost_estimate=pl.CostEstimate(flops=int(flops),
                                      transcendentals=int(Cmid + Cout),
                                      bytes_accessed=int(bytes_accessed)),
        compiler_params=pltpu.CompilerParams(vmem_limit_bytes=vmem_limit),
    )(x1_2d, x2_b, m,
      w1_2d, g1.reshape(-1, 1), be1.reshape(-1, 1),
      w2_2d, g2.reshape(-1, 1), be2.reshape(-1, 1))

    # Lane-dense (Cout, N*L2) slab -> PyTorch NCL (N, Cout, L2): wrapper-side plumbing.
    return jnp.transpose(y2d.reshape(Cout, N, L2), (1, 0, 2))


# ---------------------------------------------------------------------------
# Pure-JAX f32 reference (gather upsample + lax.conv + BN) for verification
# ---------------------------------------------------------------------------
def linear_upsample_x2_align_corners(x):
    N, C, L = x.shape
    Lout = 2 * L
    if L == 1:
        return jnp.repeat(x, Lout, axis=2)
    pos = jnp.arange(Lout, dtype=jnp.float32) * (L - 1) / (Lout - 1)
    lo = jnp.floor(pos).astype(jnp.int32)
    hi = jnp.minimum(lo + 1, L - 1)
    frac = pos - lo.astype(jnp.float32)
    return x[:, :, lo] * (1.0 - frac) + x[:, :, hi] * frac


def up_ref(x1, x2, params):
    w1, b1, g1, be1, w2, b2, g2, be2 = params
    x1u = linear_upsample_x2_align_corners(x1)
    diff = x2.shape[2] - x1u.shape[2]
    x1p = jnp.pad(x1u, ((0, 0), (0, 0), (diff // 2, diff - diff // 2)))
    x = jnp.concatenate([x2, x1p], axis=1)

    def conv(x_ncl, w_oik, b):
        y = jax.lax.conv_general_dilated(
            x_ncl, w_oik, (1,), [(PAD, PAD)],
            dimension_numbers=('NCH', 'OIH', 'NCH'))
        return y + b.reshape(1, -1, 1)

    def bn_relu(y, g, b):
        mean = jnp.mean(y, axis=(0, 2), keepdims=True)
        var = jnp.mean((y - mean) ** 2, axis=(0, 2), keepdims=True)
        return jnp.maximum(
            g.reshape(1, -1, 1) * (y - mean) * jax.lax.rsqrt(var + EPS)
            + b.reshape(1, -1, 1), 0.0)

    hmid = bn_relu(conv(x, w1, b1), g1, be1)
    return bn_relu(conv(hmid, w2, b2), g2, be2)


# ---------------------------------------------------------------------------
if __name__ == "__main__":
    key = jax.random.PRNGKey(0)
    keys = jax.random.split(key, 8)

    in_channels, out_channels = 8, 4     # up(in_channels=8, out_channels=4, bilinear=True)
    N, L1, L2 = 2, 8, 16
    c_half = in_channels // 2

    def bf16_representable(x):
        # The kernel feeds the MXU bf16 operands (with f32 accumulation); using
        # bf16-representable test data isolates algorithmic correctness from pure
        # operand-quantization error when comparing against the f32 reference.
        return x.astype(jnp.bfloat16).astype(jnp.float32)

    x1 = bf16_representable(jax.random.normal(keys[0], (N, c_half, L1), jnp.float32))
    x2 = bf16_representable(jax.random.normal(keys[1], (N, c_half, L2), jnp.float32))

    def conv_init(kw, kb, cin, cout):
        # mimics torch Conv1d default init bounds: 1/sqrt(fan_in); weight layout (O, I, K)
        bound = 1.0 / np.sqrt(cin * K)
        w = jax.random.uniform(kw, (cout, cin, K), jnp.float32, -bound, bound)
        b = jax.random.uniform(kb, (cout,), jnp.float32, -bound, bound)
        return bf16_representable(w), b

    w1, b1 = conv_init(keys[2], keys[3], in_channels, out_channels)
    w2, b2 = conv_init(keys[4], keys[5], out_channels, out_channels)
    g1 = jnp.ones((out_channels,), jnp.float32)
    be1 = jnp.zeros((out_channels,), jnp.float32)
    g2 = jnp.ones((out_channels,), jnp.float32)
    be2 = jnp.zeros((out_channels,), jnp.float32)
    params = (w1, b1, g1, be1, w2, b2, g2, be2)

    y = up_forward(x1, x2, params)
    jax.block_until_ready(y)

    y_ref = up_ref(x1, x2, params)
    # Residual mismatch stems only from bf16 rounding of the interpolation weights and
    # of the intermediate activations re-fed to the MXU (products accumulate in f32).
    np.testing.assert_allclose(np.asarray(y), np.asarray(y_ref), rtol=5e-2, atol=5e-2)
    assert y.shape == (N, out_channels, L2)
    print("KERNEL_OK")
</pallas_src>

<mosaic_0001>
module attributes {stable_mosaic.version = 11 : i64} {
  func.func @_up_double_conv_kernel(%arg0: memref<8x8xbf16, #tpu.memory_space<vmem>>, %arg1: memref<2x4x16xbf16, #tpu.memory_space<vmem>>, %arg2: memref<8x16xbf16, #tpu.memory_space<vmem>>, %arg3: memref<4x40xbf16, #tpu.memory_space<vmem>>, %arg4: memref<4x1xf32, #tpu.memory_space<vmem>>, %arg5: memref<4x1xf32, #tpu.memory_space<vmem>>, %arg6: memref<4x20xbf16, #tpu.memory_space<vmem>>, %arg7: memref<4x1xf32, #tpu.memory_space<vmem>>, %arg8: memref<4x1xf32, #tpu.memory_space<vmem>>, %arg9: memref<4x32xf32, #tpu.memory_space<vmem>>) attributes {dimension_semantics = [], scalar_prefetch = 0 : i64, scratch_operands = 0 : i64, tpu.core_type = #tpu.core_type<tc>} {
    %c0 = arith.constant 0 : index
    %c0_0 = arith.constant 0 : index
    %0 = vector.load %arg0[%c0, %c0_0] : memref<8x8xbf16, #tpu.memory_space<vmem>>, vector<8x8xbf16>
    %c0_1 = arith.constant 0 : index
    %c0_2 = arith.constant 0 : index
    %1 = vector.load %arg2[%c0_1, %c0_2] : memref<8x16xbf16, #tpu.memory_space<vmem>>, vector<8x16xbf16>
    %cst = arith.constant dense<0.000000e+00> : vector<8x16xf32>
    %2 = tpu.matmul %0, %1, %cst {dimension_numbers = #tpu.dot_dimension_numbers<[1], [0], [0], [1], [0, 0, 1, 1], [], []>} : vector<8x8xbf16>, vector<8x16xbf16>, vector<8x16xf32> -> vector<8x16xf32>
    %3 = arith.truncf %2 : vector<8x16xf32> to vector<8x16xbf16>
    %c0_3 = arith.constant 0 : index
    %c0_4 = arith.constant 0 : index
    %c0_5 = arith.constant 0 : index
    %4 = vector.load %arg1[%c0_3, %c0_4, %c0_5] : memref<2x4x16xbf16, #tpu.memory_space<vmem>>, vector<1x4x16xbf16>
    %5 = vector.shape_cast %4 : vector<1x4x16xbf16> to vector<4x16xbf16>
    %c1 = arith.constant 1 : index
    %c0_6 = arith.constant 0 : index
    %c0_7 = arith.constant 0 : index
    %6 = vector.load %arg1[%c1, %c0_6, %c0_7] : memref<2x4x16xbf16, #tpu.memory_space<vmem>>, vector<1x4x16xbf16>
    %7 = vector.shape_cast %6 : vector<1x4x16xbf16> to vector<4x16xbf16>
    %8 = tpu.concatenate %5, %7 in 1 : vector<4x16xbf16>, vector<4x16xbf16> -> vector<4x32xbf16>
    %9 = vector.extract_strided_slice %3 {offsets = [0, 0], sizes = [4, 16], strides = [1, 1]} : vector<8x16xbf16> to vector<4x16xbf16>
    %10 = vector.extract_strided_slice %3 {offsets = [4, 0], sizes = [4, 16], strides = [1, 1]} : vector<8x16xbf16> to vector<4x16xbf16>
    %11 = tpu.concatenate %9, %10 in 1 : vector<4x16xbf16>, vector<4x16xbf16> -> vector<4x32xbf16>
    %12 = tpu.concatenate %8, %11 in 0 : vector<4x32xbf16>, vector<4x32xbf16> -> vector<8x32xbf16>
    %13 = tpu.iota {dimensions = array<i32: 1>} : vector<1x32xi32>
    %c16_i32 = arith.constant 16 : i32
    %c0_i32 = arith.constant 0 : i32
    %14 = arith.cmpi eq, %c16_i32, %c0_i32 : i32
    %c1_i32 = arith.constant 1 : i32
    %15 = arith.select %14, %c1_i32, %c16_i32 : i32
    %16 = vector.broadcast %15 : i32 to vector<1x32xi32>
    %17 = arith.remsi %13, %16 : vector<1x32xi32>
    %c0_i32_8 = arith.constant 0 : i32
    %18 = vector.broadcast %c0_i32_8 : i32 to vector<1x32xi32>
    %19 = arith.cmpi ne, %17, %18 : vector<1x32xi32>
    %c0_i32_9 = arith.constant 0 : i32
    %20 = vector.broadcast %c0_i32_9 : i32 to vector<1x32xi32>
    %21 = arith.cmpi slt, %17, %20 : vector<1x32xi32>
    %c0_i32_10 = arith.constant 0 : i32
    %22 = arith.cmpi slt, %15, %c0_i32_10 : i32
    %23 = vector.broadcast %22 : i1 to vector<1x32xi1>
    %24 = vector.broadcast %23 : vector<1x32xi1> to vector<1x32xi1>
    %25 = arith.xori %21, %24 : vector<1x32xi1>
    %26 = arith.andi %25, %19 : vector<1x32xi1>
    %27 = vector.broadcast %15 : i32 to vector<1x32xi32>
    %28 = arith.addi %17, %27 : vector<1x32xi32>
    %29 = arith.select %26, %28, %17 : vector<1x32xi1>, vector<1x32xi32>
    %c2_i32 = arith.constant 2 : i32
    %30 = vector.broadcast %c2_i32 : i32 to vector<1x32xi32>
    %31 = arith.cmpi sge, %29, %30 : vector<1x32xi32>
    %c1_i32_11 = arith.constant 1 : i32
    %32 = vector.broadcast %c1_i32_11 : i32 to vector<1x32xi32>
    %33 = arith.cmpi sge, %29, %32 : vector<1x32xi32>
    %c15_i32 = arith.constant 15 : i32
    %34 = vector.broadcast %c15_i32 : i32 to vector<1x32xi32>
    %35 = arith.cmpi slt, %29, %34 : vector<1x32xi32>
    %c14_i32 = arith.constant 14 : i32
    %36 = vector.broadcast %c14_i32 : i32 to vector<1x32xi32>
    %37 = arith.cmpi slt, %29, %36 : vector<1x32xi32>
    %c0_12 = arith.constant 0 : index
    %c0_13 = arith.constant 0 : index
    %38 = vector.load %arg3[%c0_12, %c0_13] : memref<4x40xbf16, #tpu.memory_space<vmem>>, vector<4x40xbf16>
    %39 = vector.extract_strided_slice %12 {offsets = [0, 30], sizes = [8, 2], strides = [1, 1]} : vector<8x32xbf16> to vector<8x2xbf16>
    %40 = vector.extract_strided_slice %12 {offsets = [0, 0], sizes = [8, 30], strides = [1, 1]} : vector<8x32xbf16> to vector<8x30xbf16>
    %41 = tpu.concatenate %39, %40 in 1 : vector<8x2xbf16>, vector<8x30xbf16> -> vector<8x32xbf16>
    %c0_i32_14 = arith.constant 0 : i32
    %42 = arith.sitofp %c0_i32_14 : i32 to bf16
    %43 = vector.shape_cast %31 : vector<1x32xi1> to vector<1x32xi1>
    %44 = vector.broadcast %43 : vector<1x32xi1> to vector<8x32xi1>
    %45 = vector.broadcast %42 : bf16 to vector<8x32xbf16>
    %46 = arith.select %44, %41, %45 : vector<8x32xi1>, vector<8x32xbf16>
    %47 = vector.extract_strided_slice %12 {offsets = [0, 31], sizes = [8, 1], strides = [1, 1]} : vector<8x32xbf16> to vector<8x1xbf16>
    %48 = vector.extract_strided_slice %12 {offsets = [0, 0], sizes = [8, 31], strides = [1, 1]} : vector<8x32xbf16> to vector<8x31xbf16>
    %49 = tpu.concatenate %47, %48 in 1 : vector<8x1xbf16>, vector<8x31xbf16> -> vector<8x32xbf16>
    %c0_i32_15 = arith.constant 0 : i32
    %50 = arith.sitofp %c0_i32_15 : i32 to bf16
    %51 = vector.shape_cast %33 : vector<1x32xi1> to vector<1x32xi1>
    %52 = vector.broadcast %51 : vector<1x32xi1> to vector<8x32xi1>
    %53 = vector.broadcast %50 : bf16 to vector<8x32xbf16>
    %54 = arith.select %52, %49, %53 : vector<8x32xi1>, vector<8x32xbf16>
    %55 = vector.extract_strided_slice %12 {offsets = [0, 1], sizes = [8, 31], strides = [1, 1]} : vector<8x32xbf16> to vector<8x31xbf16>
    %56 = vector.extract_strided_slice %12 {offsets = [0, 0], sizes = [8, 1], strides = [1, 1]} : vector<8x32xbf16> to vector<8x1xbf16>
    %57 = tpu.concatenate %55, %56 in 1 : vector<8x31xbf16>, vector<8x1xbf16> -> vector<8x32xbf16>
    %c0_i32_16 = arith.constant 0 : i32
    %58 = arith.sitofp %c0_i32_16 : i32 to bf16
    %59 = vector.shape_cast %35 : vector<1x32xi1> to vector<1x32xi1>
    %60 = vector.broadcast %59 : vector<1x32xi1> to vector<8x32xi1>
    %61 = vector.broadcast %58 : bf16 to vector<8x32xbf16>
    %62 = arith.select %60, %57, %61 : vector<8x32xi1>, vector<8x32xbf16>
    %63 = vector.extract_strided_slice %12 {offsets = [0, 2], sizes = [8, 30], strides = [1, 1]} : vector<8x32xbf16> to vector<8x30xbf16>
    %64 = vector.extract_strided_slice %12 {offsets = [0, 0], sizes = [8, 2], strides = [1, 1]} : vector<8x32xbf16> to vector<8x2xbf16>
    %65 = tpu.concatenate %63, %64 in 1 : vector<8x30xbf16>, vector<8x2xbf16> -> vector<8x32xbf16>
    %c0_i32_17 = arith.constant 0 : i32
    %66 = arith.sitofp %c0_i32_17 : i32 to bf16
    %67 = vector.shape_cast %37 : vector<1x32xi1> to vector<1x32xi1>
    %68 = vector.broadcast %67 : vector<1x32xi1> to vector<8x32xi1>
    %69 = vector.broadcast %66 : bf16 to vector<8x32xbf16>
    %70 = arith.select %68, %65, %69 : vector<8x32xi1>, vector<8x32xbf16>
    %71 = tpu.concatenate %46, %54, %12, %62, %70 in 0 : vector<8x32xbf16>, vector<8x32xbf16>, vector<8x32xbf16>, vector<8x32xbf16>, vector<8x32xbf16> -> vector<40x32xbf16>
    %cst_18 = arith.constant dense<0.000000e+00> : vector<4x32xf32>
    %72 = tpu.matmul %38, %71, %cst_18 {dimension_numbers = #tpu.dot_dimension_numbers<[1], [0], [0], [1], [0, 0, 1, 1], [], []>} : vector<4x40xbf16>, vector<40x32xbf16>, vector<4x32xf32> -> vector<4x32xf32>
    %cst_19 = arith.constant dense<0.000000e+00> : vector<4xf32>
    %73 = vector.multi_reduction <add>, %72, %cst_19 [1] : vector<4x32xf32> to vector<4xf32>
    %74 = vector.shape_cast %73 : vector<4xf32> to vector<4x1xf32>
    %cst_20 = arith.constant 3.200000e+01 : f32
    %75 = vector.broadcast %cst_20 : f32 to vector<4x1xf32>
    %76 = arith.divf %74, %75 : vector<4x1xf32>
    %77 = vector.broadcast %76 : vector<4x1xf32> to vector<4x32xf32>
    %78 = arith.subf %72, %77 : vector<4x32xf32>
    %79 = arith.mulf %78, %78 : vector<4x32xf32>
    %cst_21 = arith.constant dense<0.000000e+00> : vector<4xf32>
    %80 = vector.multi_reduction <add>, %79, %cst_21 [1] : vector<4x32xf32> to vector<4xf32>
    %81 = vector.shape_cast %80 : vector<4xf32> to vector<4x1xf32>
    %cst_22 = arith.constant 3.200000e+01 : f32
    %82 = vector.broadcast %cst_22 : f32 to vector<4x1xf32>
    %83 = arith.divf %81, %82 : vector<4x1xf32>
    %c0_23 = arith.constant 0 : index
    %c0_24 = arith.constant 0 : index
    %84 = vector.load %arg4[%c0_23, %c0_24] : memref<4x1xf32, #tpu.memory_space<vmem>>, vector<4x1xf32>
    %cst_25 = arith.constant 9.99999974E-6 : f32
    %85 = vector.broadcast %cst_25 : f32 to vector<4x1xf32>
    %86 = arith.addf %83, %85 : vector<4x1xf32>
    %87 = math.rsqrt %86 : vector<4x1xf32>
    %88 = arith.mulf %84, %87 : vector<4x1xf32>
    %c0_26 = arith.constant 0 : index
    %c0_27 = arith.constant 0 : index
    %89 = vector.load %arg5[%c0_26, %c0_27] : memref<4x1xf32, #tpu.memory_space<vmem>>, vector<4x1xf32>
    %90 = arith.mulf %76, %88 : vector<4x1xf32>
    %91 = arith.subf %89, %90 : vector<4x1xf32>
    %92 = vector.broadcast %88 : vector<4x1xf32> to vector<4x32xf32>
    %93 = arith.mulf %72, %92 : vector<4x32xf32>
    %94 = vector.broadcast %91 : vector<4x1xf32> to vector<4x32xf32>
    %95 = arith.addf %93, %94 : vector<4x32xf32>
    %cst_28 = arith.constant 0.000000e+00 : f32
    %96 = vector.broadcast %cst_28 : f32 to vector<4x32xf32>
    %97 = arith.maximumf %95, %96 : vector<4x32xf32>
    %c0_29 = arith.constant 0 : index
    %c0_30 = arith.constant 0 : index
    %98 = vector.load %arg6[%c0_29, %c0_30] : memref<4x20xbf16, #tpu.memory_space<vmem>>, vector<4x20xbf16>
    %99 = arith.truncf %97 : vector<4x32xf32> to vector<4x32xbf16>
    %100 = vector.extract_strided_slice %99 {offsets = [0, 30], sizes = [4, 2], strides = [1, 1]} : vector<4x32xbf16> to vector<4x2xbf16>
    %101 = vector.extract_strided_slice %99 {offsets = [0, 0], sizes = [4, 30], strides = [1, 1]} : vector<4x32xbf16> to vector<4x30xbf16>
    %102 = tpu.concatenate %100, %101 in 1 : vector<4x2xbf16>, vector<4x30xbf16> -> vector<4x32xbf16>
    %c0_i32_31 = arith.constant 0 : i32
    %103 = arith.sitofp %c0_i32_31 : i32 to bf16
    %104 = vector.shape_cast %31 : vector<1x32xi1> to vector<1x32xi1>
    %105 = vector.broadcast %104 : vector<1x32xi1> to vector<4x32xi1>
    %106 = vector.broadcast %103 : bf16 to vector<4x32xbf16>
    %107 = arith.select %105, %102, %106 : vector<4x32xi1>, vector<4x32xbf16>
    %108 = vector.extract_strided_slice %99 {offsets = [0, 31], sizes = [4, 1], strides = [1, 1]} : vector<4x32xbf16> to vector<4x1xbf16>
    %109 = vector.extract_strided_slice %99 {offsets = [0, 0], sizes = [4, 31], strides = [1, 1]} : vector<4x32xbf16> to vector<4x31xbf16>
    %110 = tpu.concatenate %108, %109 in 1 : vector<4x1xbf16>, vector<4x31xbf16> -> vector<4x32xbf16>
    %c0_i32_32 = arith.constant 0 : i32
    %111 = arith.sitofp %c0_i32_32 : i32 to bf16
    %112 = vector.shape_cast %33 : vector<1x32xi1> to vector<1x32xi1>
    %113 = vector.broadcast %112 : vector<1x32xi1> to vector<4x32xi1>
    %114 = vector.broadcast %111 : bf16 to vector<4x32xbf16>
    %115 = arith.select %113, %110, %114 : vector<4x32xi1>, vector<4x32xbf16>
    %116 = vector.extract_strided_slice %99 {offsets = [0, 1], sizes = [4, 31], strides = [1, 1]} : vector<4x32xbf16> to vector<4x31xbf16>
    %117 = vector.extract_strided_slice %99 {offsets = [0, 0], sizes = [4, 1], strides = [1, 1]} : vector<4x32xbf16> to vector<4x1xbf16>
    %118 = tpu.concatenate %116, %117 in 1 : vector<4x31xbf16>, vector<4x1xbf16> -> vector<4x32xbf16>
    %c0_i32_33 = arith.constant 0 : i32
    %119 = arith.sitofp %c0_i32_33 : i32 to bf16
    %120 = vector.shape_cast %35 : vector<1x32xi1> to vector<1x32xi1>
    %121 = vector.broadcast %120 : vector<1x32xi1> to vector<4x32xi1>
    %122 = vector.broadcast %119 : bf16 to vector<4x32xbf16>
    %123 = arith.select %121, %118, %122 : vector<4x32xi1>, vector<4x32xbf16>
    %124 = vector.extract_strided_slice %99 {offsets = [0, 2], sizes = [4, 30], strides = [1, 1]} : vector<4x32xbf16> to vector<4x30xbf16>
    %125 = vector.extract_strided_slice %99 {offsets = [0, 0], sizes = [4, 2], strides = [1, 1]} : vector<4x32xbf16> to vector<4x2xbf16>
    %126 = tpu.concatenate %124, %125 in 1 : vector<4x30xbf16>, vector<4x2xbf16> -> vector<4x32xbf16>
    %c0_i32_34 = arith.constant 0 : i32
    %127 = arith.sitofp %c0_i32_34 : i32 to bf16
    %128 = vector.shape_cast %37 : vector<1x32xi1> to vector<1x32xi1>
    %129 = vector.broadcast %128 : vector<1x32xi1> to vector<4x32xi1>
    %130 = vector.broadcast %127 : bf16 to vector<4x32xbf16>
    %131 = arith.select %129, %126, %130 : vector<4x32xi1>, vector<4x32xbf16>
    %132 = tpu.concatenate %107, %115, %99, %123, %131 in 0 : vector<4x32xbf16>, vector<4x32xbf16>, vector<4x32xbf16>, vector<4x32xbf16>, vector<4x32xbf16> -> vector<20x32xbf16>
    %cst_35 = arith.constant dense<0.000000e+00> : vector<4x32xf32>
    %133 = tpu.matmul %98, %132, %cst_35 {dimension_numbers = #tpu.dot_dimension_numbers<[1], [0], [0], [1], [0, 0, 1, 1], [], []>} : vector<4x20xbf16>, vector<20x32xbf16>, vector<4x32xf32> -> vector<4x32xf32>
    %cst_36 = arith.constant dense<0.000000e+00> : vector<4xf32>
    %134 = vector.multi_reduction <add>, %133, %cst_36 [1] : vector<4x32xf32> to vector<4xf32>
    %135 = vector.shape_cast %134 : vector<4xf32> to vector<4x1xf32>
    %cst_37 = arith.constant 3.200000e+01 : f32
    %136 = vector.broadcast %cst_37 : f32 to vector<4x1xf32>
    %137 = arith.divf %135, %136 : vector<4x1xf32>
    %138 = vector.broadcast %137 : vector<4x1xf32> to vector<4x32xf32>
    %139 = arith.subf %133, %138 : vector<4x32xf32>
    %140 = arith.mulf %139, %139 : vector<4x32xf32>
    %cst_38 = arith.constant dense<0.000000e+00> : vector<4xf32>
    %141 = vector.multi_reduction <add>, %140, %cst_38 [1] : vector<4x32xf32> to vector<4xf32>
    %142 = vector.shape_cast %141 : vector<4xf32> to vector<4x1xf32>
    %cst_39 = arith.constant 3.200000e+01 : f32
    %143 = vector.broadcast %cst_39 : f32 to vector<4x1xf32>
    %144 = arith.divf %142, %143 : vector<4x1xf32>
    %c0_40 = arith.constant 0 : index
    %c0_41 = arith.constant 0 : index
    %145 = vector.load %arg7[%c0_40, %c0_41] : memref<4x1xf32, #tpu.memory_space<vmem>>, vector<4x1xf32>
    %cst_42 = arith.constant 9.99999974E-6 : f32
    %146 = vector.broadcast %cst_42 : f32 to vector<4x1xf32>
    %147 = arith.addf %144, %146 : vector<4x1xf32>
    %148 = math.rsqrt %147 : vector<4x1xf32>
    %149 = arith.mulf %145, %148 : vector<4x1xf32>
    %c0_43 = arith.constant 0 : index
    %c0_44 = arith.constant 0 : index
    %150 = vector.load %arg8[%c0_43, %c0_44] : memref<4x1xf32, #tpu.memory_space<vmem>>, vector<4x1xf32>
    %151 = arith.mulf %137, %149 : vector<4x1xf32>
    %152 = arith.subf %150, %151 : vector<4x1xf32>
    %153 = vector.broadcast %149 : vector<4x1xf32> to vector<4x32xf32>
    %154 = arith.mulf %133, %153 : vector<4x32xf32>
    %155 = vector.broadcast %152 : vector<4x1xf32> to vector<4x32xf32>
    %156 = arith.addf %154, %155 : vector<4x32xf32>
    %cst_45 = arith.constant 0.000000e+00 : f32
    %157 = vector.broadcast %cst_45 : f32 to vector<4x32xf32>
    %158 = arith.maximumf %156, %157 : vector<4x32xf32>
    %c0_46 = arith.constant 0 : index
    %c0_47 = arith.constant 0 : index
    %159 = vector.load %arg9[%c0_46, %c0_47] : memref<4x32xf32, #tpu.memory_space<vmem>>, vector<4x32xf32>
    tpu.vector_store %arg9[%c0_46, %c0_47], %158 {strides = array<i32>} : memref<4x32xf32, #tpu.memory_space<vmem>>, vector<4x32xf32>,
    return
  }
}

</mosaic_0001>

<llo_original>
// kernel: tpu_custom_call.1
$region0: #{tpu_custom_call.1}
  #allocation0 [shape = 'u32[]', space=smem, size = 0x4, offset = 0x4, fixed_abs, tag = 'smem constant byte address 0x4 - core index']
  #allocation1 [shape = 'u32[72,128]{1,0:T(1,128)}', space=vmem, size = 0x9000, scoped, tag = 'internal scratch']
  %s0 = inlined_call_operand.vmem [shape: bf16[8,8], index: 0, kind: input, shape index: {}]
  %s1 = inlined_call_operand.vmem [shape: bf16[2,4,16], index: 1, kind: input, shape index: {}]
  %s2 = inlined_call_operand.vmem [shape: bf16[8,16], index: 2, kind: input, shape index: {}]
  %s3 = inlined_call_operand.vmem [shape: bf16[4,40], index: 3, kind: input, shape index: {}]
  %s4 = inlined_call_operand.vmem [shape: f32[4,1], index: 4, kind: input, shape index: {}]
  %s5 = inlined_call_operand.vmem [shape: f32[4,1], index: 5, kind: input, shape index: {}]
  %s6 = inlined_call_operand.vmem [shape: bf16[4,20], index: 6, kind: input, shape index: {}]
  %s7 = inlined_call_operand.vmem [shape: f32[4,1], index: 7, kind: input, shape index: {}]
  %s8 = inlined_call_operand.vmem [shape: f32[4,1], index: 8, kind: input, shape index: {}]
  %s9 = inlined_call_operand.hbm [shape: f32[4,32], index: 9, kind: output, shape index: {}]
  %s10 = sld [smem:[#allocation0]]
  $region46: #{tpu_custom_call.1} parent=0
    _
  %s12 = ssub.s32 1, %s10
  %s13 = scalar_select 0, %s12, %s10
  $region1: #{tpu_custom_call.1} parent=0
    #allocation2 [shape = 'u8[2048]{0}', space=vmem, size = 0x800, scoped, tag = 'output window, operand 0, single buffered']
    #allocation3 [shape = 's32[1]{0}', space=sflag, size = 0x4, scoped, tag = 'scoped memory for tpu_custom_call.1']
    %14 = vsyncpa [#allocation3], 0
    // Predicated region
    $region2: #{tpu_custom_call.1} parent=1 // pred_check
      _
    $region3: #{tpu_custom_call.1} parent=1 // pred_check_branch
      %16 = sbr.rel (0) target = $region5
    $region4: #{tpu_custom_call.1} parent=1 // pred_region
      _
    $region5: #{tpu_custom_call.1} parent=1 // pred_fallthru
      _
    // Predicated region
    $region6: #{tpu_custom_call.1} parent=1 // pred_check
      _
    $region7: #{tpu_custom_call.1} parent=1 // pred_check_branch
      %18 = sbr.rel (0) target = $region9
    $region8: #{tpu_custom_call.1} parent=1 // pred_region
      _
    $region9: #{tpu_custom_call.1} parent=1 // pred_fallthru
      _
    // Predicated region
    $region10: #{tpu_custom_call.1} parent=1 // pred_check
      _
    $region11: #{tpu_custom_call.1} parent=1 // pred_check_branch
      %20 = sbr.rel (0) target = $region13
    $region12: #{tpu_custom_call.1} parent=1 // pred_region
      _
    $region13: #{tpu_custom_call.1} parent=1 // pred_fallthru
      _
    // Predicated region
    $region14: #{tpu_custom_call.1} parent=1 // pred_check
      _
    $region15: #{tpu_custom_call.1} parent=1 // pred_check_branch
      %22 = sbr.rel (0) target = $region17
    $region16: #{tpu_custom_call.1} parent=1 // pred_region
      _
    $region17: #{tpu_custom_call.1} parent=1 // pred_fallthru
      _
    // Predicated region
    $region18: #{tpu_custom_call.1} parent=1 // pred_check
      _
    $region19: #{tpu_custom_call.1} parent=1 // pred_check_branch
      %24 = sbr.rel (0) target = $region21
    $region20: #{tpu_custom_call.1} parent=1 // pred_region
      _
    $region21: #{tpu_custom_call.1} parent=1 // pred_fallthru
      _
    // Predicated region
    $region22: #{tpu_custom_call.1} parent=1 // pred_check
      _
    $region23: #{tpu_custom_call.1} parent=1 // pred_check_branch
      %26 = sbr.rel (0) target = $region25
    $region24: #{tpu_custom_call.1} parent=1 // pred_region
      _
    $region25: #{tpu_custom_call.1} parent=1 // pred_fallthru
      _
    // Predicated region
    $region26: #{tpu_custom_call.1} parent=1 // pred_check
      _
    $region27: #{tpu_custom_call.1} parent=1 // pred_check_branch
      %28 = sbr.rel (0) target = $region29
    $region28: #{tpu_custom_call.1} parent=1 // pred_region
      _
    $region29: #{tpu_custom_call.1} parent=1 // pred_fallthru
      _
    // Predicated region
    $region30: #{tpu_custom_call.1} parent=1 // pred_check
      _
    $region31: #{tpu_custom_call.1} parent=1 // pred_check_branch
      %30 = sbr.rel (0) target = $region33
    $region32: #{tpu_custom_call.1} parent=1 // pred_region
      _
    $region33: #{tpu_custom_call.1} parent=1 // pred_fallthru
      _
    // Predicated region
    $region34: #{tpu_custom_call.1} parent=1 // pred_check
      _
    $region35: #{tpu_custom_call.1} parent=1 // pred_check_branch
      %32 = sbr.rel (0) target = $region37
    $region36: #{tpu_custom_call.1} parent=1 // pred_region
      _
    $region37: #{tpu_custom_call.1} parent=1 // pred_fallthru
      _
    %v34 = vld [vmem:[%s0] sm:$0xf]
    %v35 = vld [vmem:[%s2] sm:$0xf]
    %vm36 = vcmask 64512
    %v38 = vsel %vm36, %v34, 0
    %vm40 = vcmask 1043456
    %v42 = vsel %vm40, %v35, 0
    %44 = vmatpush.bf16.msra.mxu0 0
    %45 = vmatpush.bf16.msra.mxu0 0
    %46 = vmatpush.bf16.msra.mxu0 0
    %47 = vmatpush.bf16.msra.mxu0 0
    %48 = vmatpush.bf16.msra.mxu0 0
    %49 = vmatpush.bf16.msra.mxu0 0
    %50 = vmatpush.bf16.msra.mxu0 0
    %51 = vmatpush.bf16.msra.mxu0 %v42
    %52 = vmatmul.bf16.gmra.mxu0 %v38
    %v53 = vpop.f32.mrf.mxu0
    %v54 = vadd.f32 0.0, %v53
    %v55 = vpop.f32.mrf.mxu0
    %56 = vdwg.mxu0
    %v57 = vpack.c.bf16 %v54, %v54
    %v58 = vld [vmem:[%s1] sm:$0x3]
    %s59 = scalar_lea.vmem %s1, 2
    %v60 = vld [vmem:[%s59] sm:$0x3]
    %62 = vst [vmem:[#allocation1] ss:$4 sm:$0xff] %v60
    %v63 = vld.sshfl [vmem:[#allocation1] sm:$0xff pattern:$0x73625140]
    %65 = vrot.lane.b32.xlu0 %v63, 16
    %v66 = vpop.permute.xlu0 %65
    %vm67 = vcmask 130048
    %v70 = vsel %vm67, %v58, %v66
    %v72 = vunpack.c.l.b16 %v57
    %v73 = vpack.c.b16 %v72, %v72
    %v74 = vrot.slane %v73, 2
    %75 = vrot.lane.b32.xlu0 %v74, 16
    %v76 = vpop.permute.xlu0 %75
    %v79 = vsel %vm67, %v57, %v76
    %v81 = vrot.slane %v79, 6
    %vm82 = vcmask 1041408
    %v84 = vsel %vm82, %v70, %v81
    %v85 = vlaneseq
    %v86 = vand.u32 %v85, 127
    %vm87 = vcmp.lt.s32.totalorder %v86, 0
    %v88 = vsub.s32 0, %v86
    %v89 = vsel %vm87, %v88, %v86
    %v90 = vshrl.u32 %v89, 4
    %v91 = vand.u32 %v89, 15
    %v92 = vsub.s32 0, %v91
    %v93 = vsel %vm87, %v92, %v91
    %vm94 = vcmp.ne.s32.totalorder %v93, 0
    %vm95 = vcmp.lt.s32.totalorder %v93, 0
    %vm96 = vmand %vm95, %vm94
    %v97 = vadd.s32 %v93, 16
    %v98 = vsel %vm96, %v97, %v93
    %vm99 = vcmp.ge.s32.totalorder %v98, 2
    %vm100 = vcmp.ge.s32.totalorder %v98, 1
    %vm101 = vcmp.lt.s32.totalorder %v98, 15
    %vm102 = vcmp.lt.s32.totalorder %v98, 14
    %v103 = vld [vmem:[%s3] sm:$0x3]
    %105 = vrot.lane.b32.xlu0 %v84, 98
    %v106 = vpop.permute.xlu0 %105
    %107 = vrot.lane.b32.xlu0 %v84, 2
    %v108 = vpop.permute.xlu0 %107
    %vm109 = vcmask 15360
    %v112 = vsel %vm109, %v106, %v108
    %v114 = vsel %vm99, 1, 0
    %vm115 = vcmp.eq.s32.totalorder %v114, 1
    %vm116 = vmpackc.low %vm115, %vm115
    %v117 = vsel %vm116, %v112, 0
    %118 = vrot.lane.b32.xlu0 %v84, 97
    %v119 = vpop.permute.xlu0 %118
    %120 = vrot.lane.b32.xlu0 %v84, 1
    %v121 = vpop.permute.xlu0 %120
    %vm122 = vcmask 7168
    %v125 = vsel %vm122, %v119, %v121
    %v127 = vsel %vm100, 1, 0
    %vm128 = vcmp.eq.s32.totalorder %v127, 1
    %vm129 = vmpackc.low %vm128, %vm128
    %v130 = vsel %vm129, %v125, 0
    %131 = vrot.lane.b32.xlu0 %v84, 127
    %v132 = vpop.permute.xlu0 %131
    %133 = vrot.lane.b32.xlu0 %v84, 31
    %v134 = vpop.permute.xlu0 %133
    %vm135 = vcmask 252928
    %v138 = vsel %vm135, %v132, %v134
    %v140 = vsel %vm101, 1, 0
    %vm141 = vcmp.eq.s32.totalorder %v140, 1
    %vm142 = vmpackc.low %vm141, %vm141
    %v143 = vsel %vm142, %v138, 0
    %144 = vrot.lane.b32.xlu0 %v84, 126
    %v145 = vpop.permute.xlu0 %144
    %146 = vrot.lane.b32.xlu0 %v84, 30
    %v147 = vpop.permute.xlu0 %146
    %vm148 = vcmask 244736
    %v151 = vsel %vm148, %v145, %v147
    %v153 = vsel %vm102, 1, 0
    %vm154 = vcmp.eq.s32.totalorder %v153, 1
    %vm155 = vmpackc.low %vm154, %vm154
    %v156 = vsel %vm155, %v151, 0
    %v158 = vrot.slane %v130, 4
    %v160 = vrot.slane %v143, 4
    %v163 = vsel %vm40, %v117, %v158
    %v166 = vsel %vm40, %v84, %v160
    %vm168 = vcmask 326656
    %v170 = vsel %vm168, %v103, 0
    %v173 = vsel %vm40, %v156, 0
    %175 = vmatpush.bf16.msra.mxu0 0
    %176 = vmatpush.bf16.msra.mxu0 0
    %177 = vmatpush.bf16.msra.mxu0 0
    %178 = vmatpush.bf16.msra.mxu0 0
    %179 = vmatpush.bf16.msra.mxu0 0
    %180 = vmatpush.bf16.msra.mxu0 %v173
    %181 = vmatpush.bf16.msra.mxu0 %v166
    %182 = vmatpush.bf16.msra.mxu0 %v163
    %183 = vmatmul.bf16.gmra.mxu0 %v170
    %v184 = vpop.f32.mrf.mxu0
    %v185 = vadd.f32 0.0, %v184
    %v186 = vpop.f32.mrf.mxu0
    %187 = vdwg.mxu0
    %vm188 = vcmask 257024
    %v189 = vsel %vm188, %v185, 0.0
    %190 = vadd.xlane.f32.xlu0 %v189
    %v191 = vpop.xlane.xlu0 %190
    %v192 = vrcp.pop 32.0
    %v193 = vmul.f32 32.0, %v192
    %v194 = vsub.f32 1.0, %v193
    %v195 = vmul.f32 %v192, %v194
    %v196 = vadd.f32 %v192, %v195
    %vm197 = vweird.f32 %v192
    %v198 = vsel %vm197, %v192, %v196
    %v199 = vmul.f32 %v191, %v198
    %v200 = vsub.f32 %v185, %v199
    %v201 = vmul.f32 %v200, %v200
    %v202 = vsel %vm188, %v201, 0.0
    %203 = vadd.xlane.f32.xlu0 %v202
    %v204 = vpop.xlane.xlu0 %203
    %v205 = vmul.f32 %v204, %v198
    %v206 = vld [vmem:[%s4] sm:$0xf]
    %v207 = vadd.f32 %v205, 1e-05
    %v208 = vrsqrt.pop %v207
    %v209 = vmul.f32 %v208, %v207
    %v210 = vmul.f32 %v209, %v208
    %v211 = vmul.f32 0.5, %v210
    %v212 = vsub.f32 1.5, %v211
    %v213 = vmul.f32 %v208, %v212
    %vm214 = vweird.f32 %v207
    %vm215 = vweird.f32 %v208
    %vm216 = vmor %vm214, %vm215
    %v217 = vsel %vm216, %v208, %v213
    %v218 = vmul.f32 %v206, %v217
    %v219 = vld [vmem:[%s5] sm:$0xf]
    %v220 = vmul.f32 %v199, %v218
    %v221 = vsub.f32 %v219, %v220
    %223 = vset.pattern.permute.xlu0 0
    %224 = vperm.xlu0 %223, %v218
    %v225 = vpop.permute.xlu0 %224
    %v227 = vmul.f32 %v185, %v225
    %229 = vset.pattern.permute.xlu0 0
    %230 = vperm.xlu0 %229, %v221
    %v231 = vpop.permute.xlu0 %230
    %v233 = vadd.f32 %v227, %v231
    %v234 = vmax.f32 %v233, 0.0
    %v235 = vld [vmem:[%s6] sm:$0x3]
    %v236 = vpack.c.bf16 %v234, %v234
    %v238 = vunpack.c.l.b16 %v236
    %v239 = vpack.c.b16 %v238, %v238
    %240 = vrot.lane.b32.xlu0 %v239, 98
    %v241 = vpop.permute.xlu0 %240
    %242 = vrot.lane.b32.xlu0 %v239, 2
    %v243 = vpop.permute.xlu0 %242
    %v246 = vsel %vm109, %v241, %v243
    %v248 = vsel %vm116, %v246, 0
    %249 = vrot.lane.b32.xlu0 %v239, 97
    %v250 = vpop.permute.xlu0 %249
    %251 = vrot.lane.b32.xlu0 %v239, 1
    %v252 = vpop.permute.xlu0 %251
    %v255 = vsel %vm122, %v250, %v252
    %v257 = vsel %vm129, %v255, 0
    %258 = vrot.lane.b32.xlu0 %v239, 127
    %v259 = vpop.permute.xlu0 %258
    %260 = vrot.lane.b32.xlu0 %v239, 31
    %v261 = vpop.permute.xlu0 %260
    %v264 = vsel %vm135, %v259, %v261
    %v266 = vsel %vm142, %v264, 0
    %267 = vrot.lane.b32.xlu0 %v239, 126
    %v268 = vpop.permute.xlu0 %267
    %269 = vrot.lane.b32.xlu0 %v239, 30
    %v270 = vpop.permute.xlu0 %269
    %v273 = vsel %vm148, %v268, %v270
    %v275 = vsel %vm155, %v273, 0
    %v277 = vrot.slane %v257, 6
    %v279 = vrot.slane %v266, 2
    %v282 = vsel %vm82, %v248, %v277
    %v284 = vsel %vm40, %v282, %v239
    %vm285 = vcmask 1045504
    %v287 = vsel %vm285, %v284, %v279
    %vm289 = vcmask 162816
    %v291 = vsel %vm289, %v235, 0
    %v294 = vsel %vm82, %v275, 0
    %296 = vmatpush.bf16.msra.mxu0 0
    %297 = vmatpush.bf16.msra.mxu0 0
    %298 = vmatpush.bf16.msra.mxu0 0
    %299 = vmatpush.bf16.msra.mxu0 0
    %300 = vmatpush.bf16.msra.mxu0 0
    %301 = vmatpush.bf16.msra.mxu0 0
    %302 = vmatpush.bf16.msra.mxu0 %v294
    %303 = vmatpush.bf16.msra.mxu0 %v287
    %304 = vmatmul.bf16.gmra.mxu0 %v291
    %v305 = vpop.f32.mrf.mxu0
    %v306 = vadd.f32 0.0, %v305
    %v307 = vpop.f32.mrf.mxu0
    %308 = vdwg.mxu0
    %v309 = vsel %vm188, %v306, 0.0
    %310 = vadd.xlane.f32.xlu0 %v309
    %v311 = vpop.xlane.xlu0 %310
    %v312 = vmul.f32 %v311, %v198
    %v313 = vsub.f32 %v306, %v312
    %v314 = vmul.f32 %v313, %v313
    %v315 = vsel %vm188, %v314, 0.0
    %316 = vadd.xlane.f32.xlu0 %v315
    %v317 = vpop.xlane.xlu0 %316
    %v318 = vmul.f32 %v317, %v198
    %v319 = vld [vmem:[%s7] sm:$0xf]
    %v320 = vadd.f32 %v318, 1e-05
    %v321 = vrsqrt.pop %v320
    %v322 = vmul.f32 %v321, %v320
    %v323 = vmul.f32 %v322, %v321
    %v324 = vmul.f32 0.5, %v323
    %v325 = vsub.f32 1.5, %v324
    %v326 = vmul.f32 %v321, %v325
    %vm327 = vweird.f32 %v320
    %vm328 = vweird.f32 %v321
    %vm329 = vmor %vm327, %vm328
    %v330 = vsel %vm329, %v321, %v326
    %v331 = vmul.f32 %v319, %v330
    %v332 = vld [vmem:[%s8] sm:$0xf]
    %v333 = vmul.f32 %v312, %v331
    %v334 = vsub.f32 %v332, %v333
    %336 = vset.pattern.permute.xlu0 0
    %337 = vperm.xlu0 %336, %v331
    %v338 = vpop.permute.xlu0 %337
    %v340 = vmul.f32 %v306, %v338
    %342 = vset.pattern.permute.xlu0 0
    %343 = vperm.xlu0 %342, %v334
    %v344 = vpop.permute.xlu0 %343
    %v346 = vadd.f32 %v340, %v344
    %v347 = vmax.f32 %v346, 0.0
    %348 = vst.msk [vmem:[#allocation2] sm:$0xf] %vm188, %v347
    // Predicated region
    $region38: #{tpu_custom_call.1} parent=1 // pred_check
      _
    $region39: #{tpu_custom_call.1} parent=1 // pred_check_branch
      %350 = sbr.rel (0) target = $region41
    $region40: #{tpu_custom_call.1} parent=1 // pred_region
      %352 = vsyncadd [#allocation3], 0
      %s354 = sshll.u32 [#allocation2], 4
      %s355 = int_to_ptr.vmem [resolvable:$true] %s354
      %s356 = sshll.u32 %s9, 4
      %s357 = int_to_ptr.hbm [resolvable:$true] %s356
      %359 = dma.vmem_to_hbm [thread:$0]  %s355, 64, %s357, [#allocation3]
    $region41: #{tpu_custom_call.1} parent=1 // pred_fallthru
      _
    // Predicated region
    $region42: #{tpu_custom_call.1} parent=1 // pred_check
      _
    $region43: #{tpu_custom_call.1} parent=1 // pred_check_branch
      %361 = sbr.rel (0) target = $region45
    $region44: #{tpu_custom_call.1} parent=1 // pred_region
      %363 = dma.done [#allocation3], 64
    $region45: #{tpu_custom_call.1} parent=1 // pred_fallthru
      _
    %364 = vsyncpa [#allocation3], 1

</llo_original>
